<compile_context>
chip_gen: v5e
topology: v5e:2x2
jax: 0.10.0
libtpu: 0.0.40
codegen_flags: <defaults>
</compile_context>

<pallas_src>
import functools
import math

import jax
import jax.numpy as jnp
from jax.experimental import pallas as pl
from jax.experimental.pallas import tpu as pltpu


_SUB_ROWS = 8     # one sublane-tile of pixel rows per inner compute step
_LANES = 128      # lane width; pixel axis is padded to a dense (rows, 128) slab


def _pce_kernel(p_ref, t_ref, out_ref, *, eps, smoothness, normalizer,
                valid_pixels, needs_mask):
    """One grid step = one (batch n, row-tile) block.

    p_ref  : (C, TS, 128)  prediction logits (class axis leading -> off layout dims)
    t_ref  : (C, TS, 128)  target probabilities
    out_ref: (8, 128)      this tile's partial pixel-loss sums (reduced in wrapper)
    """
    pi = pl.program_id(1)
    c, ts, lanes = p_ref.shape
    n_chunks = ts // _SUB_ROWS

    def chunk_loss(ci, apply_mask):
        start = pl.multiple_of(ci * _SUB_ROWS, _SUB_ROWS)
        logits = p_ref[:, pl.ds(start, _SUB_ROWS), :].astype(jnp.float32)
        t = t_ref[:, pl.ds(start, _SUB_ROWS), :].astype(jnp.float32)

        # Softmax over the (leading, non-layout) class axis: pure per-vreg VPU ops.
        m = jnp.max(logits, axis=0, keepdims=True)
        e = jnp.exp(logits - m)
        inv = 1.0 / jnp.sum(e, axis=0, keepdims=True)   # one divide per pixel
        p = e * inv

        if smoothness > 0:
            t = jnp.clip(p, t - smoothness, t + smoothness)
        omt = 1.0 - t
        omp = 1.0 - p

        if normalizer:
            # Factored-difference form: log(1+2*eps) shifts cancel exactly.
            loss = (t * (jnp.log(t + eps) - jnp.log(p + eps))
                    + omt * (jnp.log(omt + eps) - jnp.log(omp + eps)))
        else:
            # Shift contributes +log(1+2*eps) per (class,pixel) element; the
            # wrapper adds the constant back after the mean.
            loss = -t * jnp.log(p + eps) - omt * jnp.log(omp + eps)

        loss_px = jnp.sum(loss, axis=0)                  # (8, 128), C-1 vreg adds

        if apply_mask:
            row = jax.lax.broadcasted_iota(jnp.int32, loss_px.shape, 0)
            lane = jax.lax.broadcasted_iota(jnp.int32, loss_px.shape, 1)
            flat = (pi * ts + start + row) * lanes + lane
            loss_px = jnp.where(flat < valid_pixels, loss_px, 0.0)
        return loss_px

    def tile_sum(apply_mask):
        if n_chunks == 1:
            out_ref[...] = chunk_loss(0, apply_mask)
        else:
            def body(ci, acc):
                return acc + chunk_loss(ci, apply_mask)
            out_ref[...] = jax.lax.fori_loop(
                0, n_chunks, body,
                jnp.zeros((_SUB_ROWS, lanes), jnp.float32),
                unroll=min(n_chunks, 8))

    if needs_mask:
        last = pl.num_programs(1) - 1

        @pl.when(pi != last)
        def _():
            tile_sum(False)

        @pl.when(pi == last)
        def _():
            tile_sum(True)
    else:
        tile_sum(False)


def probabilistic_cross_entropy_loss(prediction, target, *, smoothness=0.0,
                                     eps=1e-5, normalizer=True,
                                     max_tile_rows=None):
    """prediction, target: (N, C, *spatial) with matching shapes."""
    assert prediction.shape == target.shape
    shape = prediction.shape
    assert len(shape) >= 2
    n, c = int(shape[0]), int(shape[1])
    hw = int(math.prod(shape[2:]))                   # 1 if there are no spatial dims
    assert hw > 0

    # --- layout: flatten pixels, pad to a dense (rows, 128) lane slab -----------
    rows0 = pl.cdiv(hw, _LANES)
    rows = pl.cdiv(rows0, _SUB_ROWS) * _SUB_ROWS     # multiple of 8 sublane rows

    # --- generation-aware tile sizing -------------------------------------------
    try:
        vmem_cap = int(pltpu.get_tpu_info().vmem_capacity_bytes)
    except Exception:
        vmem_cap = 64 << 20                          # assume smallest (v7x per-core)
    itemsize = jnp.dtype(prediction.dtype).itemsize
    row_bytes = c * _LANES * itemsize
    # ~4 MiB DMA blocks on 128-MiB-VMEM parts (v5e/v6e), ~2 MiB on v7x; the 8-row
    # inner loop keeps live f32 temporaries small regardless of block size.
    target_block = (4 << 20) if vmem_cap >= (100 << 20) else (2 << 20)
    budget_rows = max(_SUB_ROWS,
                      (target_block // row_bytes) // _SUB_ROWS * _SUB_ROWS)
    if max_tile_rows is not None:
        budget_rows = max(_SUB_ROWS,
                          (int(max_tile_rows) // _SUB_ROWS) * _SUB_ROWS)
    ts = min(rows, budget_rows)
    grid_p = pl.cdiv(rows, ts)
    rows = grid_p * ts                               # every row tile is full
    pad_hw = rows * _LANES
    needs_mask = (pad_hw != hw)

    def _prep(x):
        # Free, contiguous reshape; zero-pad the flattened pixel axis so lanes are
        # fully occupied and tiling is uniform. Input dtype is preserved (bf16
        # inputs are NOT upcast here -> half the HBM read traffic).
        x = x.reshape(n, c, hw)
        if pad_hw != hw:
            x = jnp.pad(x, ((0, 0), (0, 0), (0, pad_hw - hw)))
        return x.reshape(n, c, rows, _LANES)

    pred = _prep(prediction)
    targ = _prep(target)

    kernel = functools.partial(
        _pce_kernel,
        eps=float(eps),
        smoothness=float(smoothness),
        normalizer=bool(normalizer),
        valid_pixels=hw,
        needs_mask=needs_mask,
    )

    block_bytes = c * ts * _LANES * itemsize
    vmem_limit = int(min(int(0.75 * vmem_cap),
                         max(32 << 20, 6 * block_bytes + (8 << 20))))

    partial_sums = pl.pallas_call(
        kernel,
        out_shape=jax.ShapeDtypeStruct((n, grid_p, _SUB_ROWS, _LANES), jnp.float32),
        grid_spec=pltpu.PrefetchScalarGridSpec(
            num_scalar_prefetch=0,
            grid=(n, grid_p),
            in_specs=[
                pl.BlockSpec((None, c, ts, _LANES), lambda ni, pi: (ni, 0, pi, 0)),
                pl.BlockSpec((None, c, ts, _LANES), lambda ni, pi: (ni, 0, pi, 0)),
            ],
            out_specs=pl.BlockSpec((None, None, _SUB_ROWS, _LANES),
                                   lambda ni, pi: (ni, pi, 0, 0)),
        ),
        compiler_params=pltpu.CompilerParams(
            dimension_semantics=("parallel", "parallel"),
            vmem_limit_bytes=vmem_limit),
    )(pred, targ)

    # loss.sum(dim=1).mean()  ==  total / (N * prod(spatial))
    result = jnp.sum(partial_sums) / (n * hw)
    if (not normalizer) and eps > 0:
        # Re-add the constant +log(1+2*eps) per (class, pixel) element that was
        # factored out of the in-kernel arithmetic.
        result = result + c * math.log1p(2.0 * eps)
    return result


def _reference(prediction, target, smoothness=0.0, eps=1e-5, normalizer=True):
    """Pure-JAX transcription of the PyTorch module (for the sanity check)."""
    def _log(x):
        if eps > 0:
            return jnp.log((x + eps) / (1.0 + 2.0 * eps))
        return jnp.log(x)

    p = jax.nn.softmax(prediction, axis=1)
    t = target
    if smoothness > 0:
        t = jnp.clip(p, t - smoothness, t + smoothness)
    omt = 1.0 - t
    loss = -t * _log(p) - omt * _log(1.0 - p)
    if normalizer:
        loss = loss + t * _log(t) + omt * _log(omt)
    return loss.sum(axis=1).mean()


if __name__ == "__main__":
    # Main deterministic example: NCHW with batch=2, classes=4, spatial=16x16.
    N, C, H, W = 2, 4, 16, 16
    key = jax.random.PRNGKey(0)
    k1, k2 = jax.random.split(key)
    prediction = jax.random.normal(k1, (N, C, H, W), dtype=jnp.float32)
    target = jax.nn.softmax(
        jax.random.normal(k2, (N, C, H, W), dtype=jnp.float32), axis=1)

    loss = probabilistic_cross_entropy_loss(prediction, target)
    jax.block_until_ready(loss)
    ref = _reference(prediction, target)
    assert jnp.allclose(loss, ref, rtol=1e-5, atol=1e-5), (loss, ref)

    # Non-128-divisible spatial + smoothness + no normalizer (padded-lane path,
    # wrapper shift constant).
    k3, k4 = jax.random.split(k1)
    pred2 = jax.random.normal(k3, (2, 3, 5, 7), dtype=jnp.float32)
    targ2 = jax.nn.softmax(jax.random.normal(k4, (2, 3, 5, 7), dtype=jnp.float32), axis=1)
    loss2 = probabilistic_cross_entropy_loss(pred2, targ2, smoothness=0.1,
                                             normalizer=False)
    ref2 = _reference(pred2, targ2, smoothness=0.1, normalizer=False)
    assert jnp.allclose(loss2, ref2, rtol=1e-5, atol=1e-5), (loss2, ref2)

    # Multi-tile path with masked tail: 34 pixel-rows, forced 8-row tiles (5 tiles).
    k5, k6 = jax.random.split(k2)
    pred3 = jax.random.normal(k5, (1, 4, 34, 128), dtype=jnp.float32)
    targ3 = jax.nn.softmax(jax.random.normal(k6, (1, 4, 34, 128), dtype=jnp.float32), axis=1)
    loss3 = probabilistic_cross_entropy_loss(pred3, targ3, max_tile_rows=8)
    ref3 = _reference(pred3, targ3)
    assert jnp.allclose(loss3, ref3, rtol=1e-5, atol=1e-5), (loss3, ref3)

    # bf16 passthrough (inputs stay bf16 in HBM; compute is f32 in VMEM).
    pred4 = prediction.astype(jnp.bfloat16)
    targ4 = target.astype(jnp.bfloat16)
    loss4 = probabilistic_cross_entropy_loss(pred4, targ4)
    ref4 = _reference(pred4.astype(jnp.float32), targ4.astype(jnp.float32))
    assert jnp.allclose(loss4, ref4, rtol=1e-4, atol=1e-4), (loss4, ref4)

    print("KERNEL_OK")
</pallas_src>

<mosaic_0001>
module attributes {stable_mosaic.version = 11 : i64} {
  func.func @_pce_kernel(%arg0: i32, %arg1: i32, %arg2: memref<1x4x8x128xf32, #tpu.memory_space<vmem>>, %arg3: memref<1x4x8x128xf32, #tpu.memory_space<vmem>>, %arg4: memref<1x1x8x128xf32, #tpu.memory_space<vmem>>) attributes {dimension_semantics = [#tpu.dimension_semantics<parallel>, #tpu.dimension_semantics<parallel>], iteration_bounds = array<i64: 2, 1>, scalar_prefetch = 0 : i64, scratch_operands = 0 : i64, tpu.core_type = #tpu.core_type<tc>, window_params = [{transform_indices = @transform_0, window_bounds = array<i64: 1, 4, 8, 128>}, {transform_indices = @transform_1, window_bounds = array<i64: 1, 4, 8, 128>}, {transform_indices = @transform_2, window_bounds = array<i64: 1, 1, 8, 128>}]} {
    %c0_i32 = arith.constant 0 : i32
    %0 = arith.cmpi ne, %arg1, %c0_i32 : i32
    %1 = arith.extui %0 : i1 to i32
    %c0_i32_0 = arith.constant 0 : i32
    %2 = arith.cmpi ne, %1, %c0_i32_0 : i32
    scf.if %2 {
      %c0_i32_3 = arith.constant 0 : i32
      %6 = tpu.assume_multiple %c0_i32_3, 8 : i32
      %c0 = arith.constant 0 : index
      %c0_4 = arith.constant 0 : index
      %7 = arith.index_cast %6 : i32 to index
      %c0_5 = arith.constant 0 : index
      %8 = vector.load %arg2[%c0, %c0_4, %7, %c0_5] : memref<1x4x8x128xf32, #tpu.memory_space<vmem>>, vector<1x4x8x128xf32>
      %9 = vector.shape_cast %8 : vector<1x4x8x128xf32> to vector<4x8x128xf32>
      %c0_6 = arith.constant 0 : index
      %c0_7 = arith.constant 0 : index
      %10 = arith.index_cast %6 : i32 to index
      %c0_8 = arith.constant 0 : index
      %11 = vector.load %arg3[%c0_6, %c0_7, %10, %c0_8] : memref<1x4x8x128xf32, #tpu.memory_space<vmem>>, vector<1x4x8x128xf32>
      %12 = vector.shape_cast %11 : vector<1x4x8x128xf32> to vector<4x8x128xf32>
      %cst = arith.constant dense<0xFF800000> : vector<8x128xf32>
      %13 = vector.multi_reduction <maximumf>, %9, %cst [0] : vector<4x8x128xf32> to vector<8x128xf32>
      %14 = vector.shape_cast %13 : vector<8x128xf32> to vector<1x8x128xf32>
      %15 = vector.broadcast %14 : vector<1x8x128xf32> to vector<4x8x128xf32>
      %16 = arith.subf %9, %15 : vector<4x8x128xf32>
      %17 = math.exp %16 : vector<4x8x128xf32>
      %cst_9 = arith.constant dense<0.000000e+00> : vector<8x128xf32>
      %18 = vector.multi_reduction <add>, %17, %cst_9 [0] : vector<4x8x128xf32> to vector<8x128xf32>
      %19 = vector.shape_cast %18 : vector<8x128xf32> to vector<1x8x128xf32>
      %cst_10 = arith.constant 1.000000e+00 : f32
      %20 = vector.broadcast %cst_10 : f32 to vector<1x8x128xf32>
      %21 = arith.divf %20, %19 : vector<1x8x128xf32>
      %22 = vector.broadcast %21 : vector<1x8x128xf32> to vector<4x8x128xf32>
      %23 = arith.mulf %17, %22 : vector<4x8x128xf32>
      %cst_11 = arith.constant 1.000000e+00 : f32
      %24 = vector.broadcast %cst_11 : f32 to vector<4x8x128xf32>
      %25 = arith.subf %24, %12 : vector<4x8x128xf32>
      %cst_12 = arith.constant 1.000000e+00 : f32
      %26 = vector.broadcast %cst_12 : f32 to vector<4x8x128xf32>
      %27 = arith.subf %26, %23 : vector<4x8x128xf32>
      %cst_13 = arith.constant 9.99999974E-6 : f32
      %28 = vector.broadcast %cst_13 : f32 to vector<4x8x128xf32>
      %29 = arith.addf %12, %28 : vector<4x8x128xf32>
      %30 = math.log %29 : vector<4x8x128xf32>
      %cst_14 = arith.constant 9.99999974E-6 : f32
      %31 = vector.broadcast %cst_14 : f32 to vector<4x8x128xf32>
      %32 = arith.addf %23, %31 : vector<4x8x128xf32>
      %33 = math.log %32 : vector<4x8x128xf32>
      %34 = arith.subf %30, %33 : vector<4x8x128xf32>
      %35 = arith.mulf %12, %34 : vector<4x8x128xf32>
      %cst_15 = arith.constant 9.99999974E-6 : f32
      %36 = vector.broadcast %cst_15 : f32 to vector<4x8x128xf32>
      %37 = arith.addf %25, %36 : vector<4x8x128xf32>
      %38 = math.log %37 : vector<4x8x128xf32>
      %cst_16 = arith.constant 9.99999974E-6 : f32
      %39 = vector.broadcast %cst_16 : f32 to vector<4x8x128xf32>
      %40 = arith.addf %27, %39 : vector<4x8x128xf32>
      %41 = math.log %40 : vector<4x8x128xf32>
      %42 = arith.subf %38, %41 : vector<4x8x128xf32>
      %43 = arith.mulf %25, %42 : vector<4x8x128xf32>
      %44 = arith.addf %35, %43 : vector<4x8x128xf32>
      %cst_17 = arith.constant dense<0.000000e+00> : vector<8x128xf32>
      %45 = vector.multi_reduction <add>, %44, %cst_17 [0] : vector<4x8x128xf32> to vector<8x128xf32>
      %c0_18 = arith.constant 0 : index
      %c0_19 = arith.constant 0 : index
      %c0_20 = arith.constant 0 : index
      %c0_21 = arith.constant 0 : index
      %46 = vector.load %arg4[%c0_18, %c0_19, %c0_20, %c0_21] : memref<1x1x8x128xf32, #tpu.memory_space<vmem>>, vector<1x1x8x128xf32>
      %47 = vector.shape_cast %46 : vector<1x1x8x128xf32> to vector<8x128xf32>
      %48 = vector.shape_cast %45 : vector<8x128xf32> to vector<1x1x8x128xf32>
      tpu.vector_store %arg4[%c0_18, %c0_19, %c0_20, %c0_21], %48 {strides = array<i32>} : memref<1x1x8x128xf32, #tpu.memory_space<vmem>>, vector<1x1x8x128xf32>,
    } else {
    }
    %c0_i32_1 = arith.constant 0 : i32
    %3 = arith.cmpi eq, %arg1, %c0_i32_1 : i32
    %4 = arith.extui %3 : i1 to i32
    %c0_i32_2 = arith.constant 0 : i32
    %5 = arith.cmpi ne, %4, %c0_i32_2 : i32
    scf.if %5 {
      %c0_i32_3 = arith.constant 0 : i32
      %6 = tpu.assume_multiple %c0_i32_3, 8 : i32
      %c0 = arith.constant 0 : index
      %c0_4 = arith.constant 0 : index
      %7 = arith.index_cast %6 : i32 to index
      %c0_5 = arith.constant 0 : index
      %8 = vector.load %arg2[%c0, %c0_4, %7, %c0_5] : memref<1x4x8x128xf32, #tpu.memory_space<vmem>>, vector<1x4x8x128xf32>
      %9 = vector.shape_cast %8 : vector<1x4x8x128xf32> to vector<4x8x128xf32>
      %c0_6 = arith.constant 0 : index
      %c0_7 = arith.constant 0 : index
      %10 = arith.index_cast %6 : i32 to index
      %c0_8 = arith.constant 0 : index
      %11 = vector.load %arg3[%c0_6, %c0_7, %10, %c0_8] : memref<1x4x8x128xf32, #tpu.memory_space<vmem>>, vector<1x4x8x128xf32>
      %12 = vector.shape_cast %11 : vector<1x4x8x128xf32> to vector<4x8x128xf32>
      %cst = arith.constant dense<0xFF800000> : vector<8x128xf32>
      %13 = vector.multi_reduction <maximumf>, %9, %cst [0] : vector<4x8x128xf32> to vector<8x128xf32>
      %14 = vector.shape_cast %13 : vector<8x128xf32> to vector<1x8x128xf32>
      %15 = vector.broadcast %14 : vector<1x8x128xf32> to vector<4x8x128xf32>
      %16 = arith.subf %9, %15 : vector<4x8x128xf32>
      %17 = math.exp %16 : vector<4x8x128xf32>
      %cst_9 = arith.constant dense<0.000000e+00> : vector<8x128xf32>
      %18 = vector.multi_reduction <add>, %17, %cst_9 [0] : vector<4x8x128xf32> to vector<8x128xf32>
      %19 = vector.shape_cast %18 : vector<8x128xf32> to vector<1x8x128xf32>
      %cst_10 = arith.constant 1.000000e+00 : f32
      %20 = vector.broadcast %cst_10 : f32 to vector<1x8x128xf32>
      %21 = arith.divf %20, %19 : vector<1x8x128xf32>
      %22 = vector.broadcast %21 : vector<1x8x128xf32> to vector<4x8x128xf32>
      %23 = arith.mulf %17, %22 : vector<4x8x128xf32>
      %cst_11 = arith.constant 1.000000e+00 : f32
      %24 = vector.broadcast %cst_11 : f32 to vector<4x8x128xf32>
      %25 = arith.subf %24, %12 : vector<4x8x128xf32>
      %cst_12 = arith.constant 1.000000e+00 : f32
      %26 = vector.broadcast %cst_12 : f32 to vector<4x8x128xf32>
      %27 = arith.subf %26, %23 : vector<4x8x128xf32>
      %cst_13 = arith.constant 9.99999974E-6 : f32
      %28 = vector.broadcast %cst_13 : f32 to vector<4x8x128xf32>
      %29 = arith.addf %12, %28 : vector<4x8x128xf32>
      %30 = math.log %29 : vector<4x8x128xf32>
      %cst_14 = arith.constant 9.99999974E-6 : f32
      %31 = vector.broadcast %cst_14 : f32 to vector<4x8x128xf32>
      %32 = arith.addf %23, %31 : vector<4x8x128xf32>
      %33 = math.log %32 : vector<4x8x128xf32>
      %34 = arith.subf %30, %33 : vector<4x8x128xf32>
      %35 = arith.mulf %12, %34 : vector<4x8x128xf32>
      %cst_15 = arith.constant 9.99999974E-6 : f32
      %36 = vector.broadcast %cst_15 : f32 to vector<4x8x128xf32>
      %37 = arith.addf %25, %36 : vector<4x8x128xf32>
      %38 = math.log %37 : vector<4x8x128xf32>
      %cst_16 = arith.constant 9.99999974E-6 : f32
      %39 = vector.broadcast %cst_16 : f32 to vector<4x8x128xf32>
      %40 = arith.addf %27, %39 : vector<4x8x128xf32>
      %41 = math.log %40 : vector<4x8x128xf32>
      %42 = arith.subf %38, %41 : vector<4x8x128xf32>
      %43 = arith.mulf %25, %42 : vector<4x8x128xf32>
      %44 = arith.addf %35, %43 : vector<4x8x128xf32>
      %cst_17 = arith.constant dense<0.000000e+00> : vector<8x128xf32>
      %45 = vector.multi_reduction <add>, %44, %cst_17 [0] : vector<4x8x128xf32> to vector<8x128xf32>
      %46 = tpu.iota {dimensions = array<i32: 0>} : vector<8x128xi32>
      %47 = tpu.iota {dimensions = array<i32: 1>} : vector<8x128xi32>
      %c8_i32 = arith.constant 8 : i32
      %48 = arith.muli %arg1, %c8_i32 : i32
      %49 = arith.addi %48, %6 : i32
      %50 = vector.broadcast %49 : i32 to vector<8x128xi32>
      %51 = arith.addi %50, %46 : vector<8x128xi32>
      %c128_i32 = arith.constant 128 : i32
      %52 = vector.broadcast %c128_i32 : i32 to vector<8x128xi32>
      %53 = arith.muli %51, %52 : vector<8x128xi32>
      %54 = arith.addi %53, %47 : vector<8x128xi32>
      %c256_i32 = arith.constant 256 : i32
      %55 = vector.broadcast %c256_i32 : i32 to vector<8x128xi32>
      %56 = arith.cmpi slt, %54, %55 : vector<8x128xi32>
      %cst_18 = arith.constant 0.000000e+00 : f32
      %57 = vector.broadcast %cst_18 : f32 to vector<8x128xf32>
      %58 = arith.select %56, %45, %57 : vector<8x128xi1>, vector<8x128xf32>
      %c0_19 = arith.constant 0 : index
      %c0_20 = arith.constant 0 : index
      %c0_21 = arith.constant 0 : index
      %c0_22 = arith.constant 0 : index
      %59 = vector.load %arg4[%c0_19, %c0_20, %c0_21, %c0_22] : memref<1x1x8x128xf32, #tpu.memory_space<vmem>>, vector<1x1x8x128xf32>
      %60 = vector.shape_cast %59 : vector<1x1x8x128xf32> to vector<8x128xf32>
      %61 = vector.shape_cast %58 : vector<8x128xf32> to vector<1x1x8x128xf32>
      tpu.vector_store %arg4[%c0_19, %c0_20, %c0_21, %c0_22], %61 {strides = array<i32>} : memref<1x1x8x128xf32, #tpu.memory_space<vmem>>, vector<1x1x8x128xf32>,
    } else {
    }
    return
  }
  func.func @transform_0(%arg0: i32, %arg1: i32) -> (i32, i32, i32, i32) {
    %c0_i32 = arith.constant 0 : i32
    %c0_i32_0 = arith.constant 0 : i32
    %c0_i32_1 = arith.constant 0 : i32
    return %arg0, %c0_i32, %arg1, %c0_i32_0 : i32, i32, i32, i32
  }
  func.func @transform_1(%arg0: i32, %arg1: i32) -> (i32, i32, i32, i32) {
    %c0_i32 = arith.constant 0 : i32
    %c0_i32_0 = arith.constant 0 : i32
    %c0_i32_1 = arith.constant 0 : i32
    return %arg0, %c0_i32, %arg1, %c0_i32_0 : i32, i32, i32, i32
  }
  func.func @transform_2(%arg0: i32, %arg1: i32) -> (i32, i32, i32, i32) {
    %c0_i32 = arith.constant 0 : i32
    %c0_i32_0 = arith.constant 0 : i32
    %c0_i32_1 = arith.constant 0 : i32
    return %arg0, %arg1, %c0_i32, %c0_i32_0 : i32, i32, i32, i32
  }
}

</mosaic_0001>

<llo_original>
// kernel: tpu_custom_call.1
$region0: #{tpu_custom_call.1}
  #allocation0 [shape = 'u32[]', space=smem, size = 0x4, offset = 0x4, fixed_abs, tag = 'smem constant byte address 0x4 - core index']
  #allocation1 [shape = 'u32[72,128]{1,0:T(1,128)}', space=vmem, size = 0x9000, scoped, tag = 'internal scratch']
  %s0 = inlined_call_operand.hbm [shape: f32[2,4,8,128], index: 0, kind: input, shape index: {}]
  %s1 = inlined_call_operand.hbm [shape: f32[2,4,8,128], index: 1, kind: input, shape index: {}]
  %s2 = inlined_call_operand.hbm [shape: f32[2,1,8,128], index: 2, kind: output, shape index: {}]
  %s3 = sld [smem:[#allocation0]]
  $region57: #{tpu_custom_call.1} parent=0
    _
  %s5 = ssub.s32 1, %s3
  %s6 = scalar_select 0, %s5, %s3
  $region1: #{tpu_custom_call.1} parent=0
    #allocation2 [shape = 'u8[32768]{0}', space=vmem, size = 0x8000, scoped, tag = 'input window, operand 0']
    #allocation3 [shape = 's32[2]{0}', space=sflag, size = 0x8, scoped, tag = 'scoped memory for tpu_custom_call.1']
    #allocation4 [shape = 's32[2]{0}', space=sflag, size = 0x8, scoped, tag = 'scoped memory for tpu_custom_call.1']
    #allocation5 [shape = 'u8[32768]{0}', space=vmem, size = 0x8000, scoped, tag = 'input window, operand 1']
    #allocation6 [shape = 's32[2]{0}', space=sflag, size = 0x8, scoped, tag = 'scoped memory for tpu_custom_call.1']
    #allocation7 [shape = 'u8[8192]{0}', space=vmem, size = 0x2000, scoped, tag = 'output window, operand 0']
    %7 = vsyncpa [#allocation3], 0
    %s8 = scalar_lea.sflag [#allocation3], 1
    %9 = vsyncpa %s8, 0
    %10 = vsyncpa [#allocation6], 0
    %s11 = scalar_lea.sflag [#allocation6], 1
    %12 = vsyncpa %s11, 0
    %13 = vsyncpa [#allocation4], 0
    %s14 = scalar_lea.sflag [#allocation4], 1
    %15 = vsyncpa %s14, 0
    loop: start=0, step=1, limit=4
    $region2: #{tpu_custom_call.1} parent=1 // loop_pre_header
      _
    $region3: #{tpu_custom_call.1} parent=1 // loop_header
      %s17 = sphi 0, %s21
      %p18 = scmp.ge.s32.totalorder %s17, 4
      %s24 = sphi 0, %s36
      %s25 = sphi 0, %s32
      %s26 = sphi 0, %s24
      %s27 = sphi 0, %s25
      %s28 = sphi 0, %s26
      %s29 = sphi 0, %s27
      %s41 = sphi 0, %s43
      %s44 = sphi 0, %s41
      %s45 = sphi 0, %s44
      %s61 = sphi 0, %s45
      %s69 = sphi 0, %s71
      %s72 = sphi 0, %s69
      %s73 = sphi 0, %s72
      %s89 = sphi 0, %s73
      %s97 = sphi 0, %s99
      %s100 = sphi 0, %s97
      %s101 = sphi 0, %s100
      %s117 = sphi 0, %s101
    $region4: #{tpu_custom_call.1} parent=1 // loop_header_branch
      %20 = sbr.rel (%p18) target = $region8
    $region5: #{tpu_custom_call.1} parent=1 // loop_body
      %s22 = ssub.s32 %s17, 1
      %s23 = ssub.s32 %s17, 2
      %s30 = sadd.s32 1, %s25
      %p31 = scmp.ge.s32.totalorder %s30, 1
      %s32 = scalar_select %p31, 0, %s30
      %s33 = sadd.s32 1, %s24
      %s34 = scalar_select %p31, %s33, %s24
      %p35 = scmp.ge.s32.totalorder %s34, 2
      %s36 = scalar_select %p35, 0, %s34
      %s37 = ssub.s32 %s24, %s36
      %s38 = ssub.s32 %s25, %s32
      %s39 = sor.u32 %s37, %s38
      %p40 = scmp.eq.s32.totalorder %s39, 0
      %s42 = sadd.s32 %s41, 1
      %s43 = scalar_select %p40, %s41, %s42
      %p46 = pneg %p40
      %p47 = scmp.eq.s32.totalorder %s17, 1
      %p48 = por %p46, %p47
      %p49 = scmp.ne.s32.totalorder %s41, %s44
      %p50 = scmp.eq.s32.totalorder %s17, 0
      %p51 = por %p49, %p50
      %p52 = scmp.ne.s32.totalorder %s41, %s44
      %p53 = scmp.eq.s32.totalorder %s22, 1
      %p54 = por %p52, %p53
      %p55 = scmp.ne.s32.totalorder %s44, %s45
      %p56 = scmp.eq.s32.totalorder %s22, 0
      %p57 = por %p55, %p56
      %p58 = scmp.ne.s32.totalorder %s44, %s45
      %p59 = scmp.eq.s32.totalorder %s23, 1
      %p60 = por %p58, %p59
      %p62 = scmp.ne.s32.totalorder %s45, %s61
      %p63 = scmp.eq.s32.totalorder %s23, 0
      %p64 = por %p62, %p63
      %s65 = ssub.s32 %s24, %s36
      %s66 = ssub.s32 %s25, %s32
      %s67 = sor.u32 %s65, %s66
      %p68 = scmp.eq.s32.totalorder %s67, 0
      %s70 = sadd.s32 %s69, 1
      %s71 = scalar_select %p68, %s69, %s70
      %p74 = pneg %p68
      %p75 = scmp.eq.s32.totalorder %s17, 1
      %p76 = por %p74, %p75
      %p77 = scmp.ne.s32.totalorder %s69, %s72
      %p78 = scmp.eq.s32.totalorder %s17, 0
      %p79 = por %p77, %p78
      %p80 = scmp.ne.s32.totalorder %s69, %s72
      %p81 = scmp.eq.s32.totalorder %s22, 1
      %p82 = por %p80, %p81
      %p83 = scmp.ne.s32.totalorder %s72, %s73
      %p84 = scmp.eq.s32.totalorder %s22, 0
      %p85 = por %p83, %p84
      %p86 = scmp.ne.s32.totalorder %s72, %s73
      %p87 = scmp.eq.s32.totalorder %s23, 1
      %p88 = por %p86, %p87
      %p90 = scmp.ne.s32.totalorder %s73, %s89
      %p91 = scmp.eq.s32.totalorder %s23, 0
      %p92 = por %p90, %p91
      %s93 = ssub.s32 %s24, %s36
      %s94 = ssub.s32 %s25, %s32
      %s95 = sor.u32 %s93, %s94
      %p96 = scmp.eq.s32.totalorder %s95, 0
      %s98 = sadd.s32 %s97, 1
      %s99 = scalar_select %p96, %s97, %s98
      %p102 = pneg %p96
      %p103 = scmp.eq.s32.totalorder %s17, 1
      %p104 = por %p102, %p103
      %p105 = scmp.ne.s32.totalorder %s97, %s100
      %p106 = scmp.eq.s32.totalorder %s17, 0
      %p107 = por %p105, %p106
      %p108 = scmp.ne.s32.totalorder %s97, %s100
      %p109 = scmp.eq.s32.totalorder %s22, 1
      %p110 = por %p108, %p109
      %p111 = scmp.ne.s32.totalorder %s100, %s101
      %p112 = scmp.eq.s32.totalorder %s22, 0
      %p113 = por %p111, %p112
      %p114 = scmp.ne.s32.totalorder %s100, %s101
      %p115 = scmp.eq.s32.totalorder %s23, 1
      %p116 = por %p114, %p115
      %p118 = scmp.ne.s32.totalorder %s101, %s117
      %p119 = scmp.eq.s32.totalorder %s23, 0
      %p120 = por %p118, %p119
      %p121 = scmp.le.s32.totalorder 1, %s17
      %p122 = scmp.lt.s32.totalorder %s17, 3
      %p123 = pnand %p121, %p122
      %p124 = pneg %p123
      // Predicated region
      $region9: #{tpu_custom_call.1} parent=5 // pred_check
        _
      $region10: #{tpu_custom_call.1} parent=5 // pred_check_branch
        %126 = sbr.rel (%p123) target = $region12
      $region11: #{tpu_custom_call.1} parent=5 // pred_region
        %s127 = ssub.s32 %s17, 1
      $region12: #{tpu_custom_call.1} parent=5 // pred_fallthru
        _
      %p128 = scmp.lt.s32.totalorder %s17, 2
      // Predicated region
      $region13: #{tpu_custom_call.1} parent=5 // pred_check
        %p129 = pneg %p128
      $region14: #{tpu_custom_call.1} parent=5 // pred_check_branch
        %131 = sbr.rel (%p129) target = $region16
      $region15: #{tpu_custom_call.1} parent=5 // pred_region
        // Predicated region
        $region17: #{tpu_custom_call.1} parent=15 // pred_check
          %p132 = pneg %p51
        $region18: #{tpu_custom_call.1} parent=15 // pred_check_branch
          %134 = sbr.rel (%p132) target = $region20
        $region19: #{tpu_custom_call.1} parent=15 // pred_region
          %s135 = sand.u32 %s41, 1
          %s136 = scalar_lea.sflag [#allocation3], %s135
          %s137 = sand.u32 %s41, 1
          %s138 = smul.addr %s137, 32
          %s139 = scalar_lea.vmem [#allocation2], %s138
          %141 = vsyncadd %s136, 0
          %s142 = smul.addr %s24, 4
          %s143 = sadd.s32 %s25, %s142
          %s144 = smul.addr %s143, 8
          %s145 = scalar_lea.hbm %s0, %s144
          %s146 = sshll.u32 %s145, 4
          %s147 = int_to_ptr.hbm [resolvable:$true] %s146
          %s148 = sshll.u32 %s139, 4
          %s149 = int_to_ptr.vmem [resolvable:$true] %s148
          %154 = dma.hbm_to_vmem [thread:$0]  %s147, 512, %s149, %s136, 128, 128, 8
        $region20: #{tpu_custom_call.1} parent=15 // pred_fallthru
          _
        // Predicated region
        $region21: #{tpu_custom_call.1} parent=15 // pred_check
          %p155 = pneg %p79
        $region22: #{tpu_custom_call.1} parent=15 // pred_check_branch
          %157 = sbr.rel (%p155) target = $region24
        $region23: #{tpu_custom_call.1} parent=15 // pred_region
          %s158 = sand.u32 %s69, 1
          %s159 = scalar_lea.sflag [#allocation6], %s158
          %s160 = sand.u32 %s69, 1
          %s161 = smul.addr %s160, 32
          %s162 = scalar_lea.vmem [#allocation5], %s161
          %164 = vsyncadd %s159, 0
          %s165 = smul.addr %s24, 4
          %s166 = sadd.s32 %s25, %s165
          %s167 = smul.addr %s166, 8
          %s168 = scalar_lea.hbm %s1, %s167
          %s169 = sshll.u32 %s168, 4
          %s170 = int_to_ptr.hbm [resolvable:$true] %s169
          %s171 = sshll.u32 %s162, 4
          %s172 = int_to_ptr.vmem [resolvable:$true] %s171
          %177 = dma.hbm_to_vmem [thread:$0]  %s170, 512, %s172, %s159, 128, 128, 8
        $region24: #{tpu_custom_call.1} parent=15 // pred_fallthru
          _
      $region16: #{tpu_custom_call.1} parent=5 // pred_fallthru
        _
      %p178 = scmp.le.s32.totalorder 1, %s17
      %p179 = scmp.lt.s32.totalorder %s17, 3
      %p180 = pnand %p178, %p179
      %p181 = pneg %p180
      // Predicated region
      $region25: #{tpu_custom_call.1} parent=5 // pred_check
        _
      $region26: #{tpu_custom_call.1} parent=5 // pred_check_branch
        %183 = sbr.rel (%p180) target = $region28
      $region27: #{tpu_custom_call.1} parent=5 // pred_region
        %s184 = ssub.s32 %s17, 1
        %s185 = sand.u32 %s44, 1
        %s186 = scalar_lea.sflag [#allocation3], %s185
        %s187 = sand.u32 %s44, 1
        %s188 = smul.addr %s187, 32
        %s189 = scalar_lea.vmem [#allocation2], %s188
        // Predicated region
        $region29: #{tpu_custom_call.1} parent=27 // pred_check
          %p190 = pneg %p57
        $region30: #{tpu_custom_call.1} parent=27 // pred_check_branch
          %192 = sbr.rel (%p190) target = $region32
        $region31: #{tpu_custom_call.1} parent=27 // pred_region
          %194 = dma.done %s186, 512
        $region32: #{tpu_custom_call.1} parent=27 // pred_fallthru
          _
        %s195 = sand.u32 %s72, 1
        %s196 = scalar_lea.sflag [#allocation6], %s195
        %s197 = sand.u32 %s72, 1
        %s198 = smul.addr %s197, 32
        %s199 = scalar_lea.vmem [#allocation5], %s198
        // Predicated region
        $region33: #{tpu_custom_call.1} parent=27 // pred_check
          %p200 = pneg %p85
        $region34: #{tpu_custom_call.1} parent=27 // pred_check_branch
          %202 = sbr.rel (%p200) target = $region36
        $region35: #{tpu_custom_call.1} parent=27 // pred_region
          %204 = dma.done %s196, 512
        $region36: #{tpu_custom_call.1} parent=27 // pred_fallthru
          _
        %s205 = sand.u32 %s44, 1
        %s206 = scalar_lea.sflag [#allocation3], %s205
        %s207 = sand.u32 %s44, 1
        %s208 = smul.addr %s207, 32
        %s209 = scalar_lea.vmem [#allocation2], %s208
        %p210 = pneg %p57
        %p211 = pneg %p54
        %s212 = sand.u32 %s72, 1
        %s213 = scalar_lea.sflag [#allocation6], %s212
        %s214 = sand.u32 %s72, 1
        %s215 = smul.addr %s214, 32
        %s216 = scalar_lea.vmem [#allocation5], %s215
        %p217 = pneg %p85
        %p218 = pneg %p82
        %p219 = pneg %p113
        %p220 = pneg %p110
        %s221 = sand.u32 %s100, 1
        %s222 = scalar_lea.sflag [#allocation4], %s221
        %s223 = sand.u32 %s100, 1
        %s224 = smul.addr %s223, 8
        %s225 = scalar_lea.vmem [#allocation7], %s224
        %p226 = scmp.ne.s32.totalorder %s27, 0
        // Predicated region
        $region37: #{tpu_custom_call.1} parent=27 // pred_check
          %p227 = pneg %p226
        $region38: #{tpu_custom_call.1} parent=27 // pred_check_branch
          %229 = sbr.rel (%p227) target = $region40
        $region39: #{tpu_custom_call.1} parent=27 // pred_region
          %v230 = vld [vmem:[%s189] sm:$0xff]
          %v231 = vld [vmem:[%s189 + $0x8] sm:$0xff]
          %v232 = vld [vmem:[%s189 + $0x10] sm:$0xff]
          %v233 = vld [vmem:[%s189 + $0x18] sm:$0xff]
          %v234 = vld [vmem:[%s199] sm:$0xff]
          %v235 = vld [vmem:[%s199 + $0x8] sm:$0xff]
          %v236 = vld [vmem:[%s199 + $0x10] sm:$0xff]
          %v237 = vld [vmem:[%s199 + $0x18] sm:$0xff]
          %v238 = vmax.f32 %v230, %v231
          %v239 = vmax.f32 %v232, %v233
          %v240 = vmax.f32 %v238, %v239
          %v241 = vsub.f32 %v230, %v240
          %v242 = vsub.f32 %v231, %v240
          %v243 = vsub.f32 %v232, %v240
          %v244 = vsub.f32 %v233, %v240
          %v245 = vmul.f32 %v241, 1.442695
          %v246 = vpow.pop %v245
          %v247 = vmul.f32 %v242, 1.442695
          %v248 = vpow.pop %v247
          %v249 = vmul.f32 %v243, 1.442695
          %v250 = vpow.pop %v249
          %v251 = vmul.f32 %v244, 1.442695
          %v252 = vpow.pop %v251
          %v253 = vadd.f32 %v246, %v248
          %v254 = vadd.f32 %v253, %v250
          %v255 = vadd.f32 %v254, %v252
          %v256 = vrcp.pop %v255
          %v257 = vmul.f32 %v255, %v256
          %v258 = vsub.f32 1.0, %v257
          %v259 = vmul.f32 %v256, %v258
          %v260 = vadd.f32 %v256, %v259
          %vm261 = vweird.f32 %v255
          %vm262 = vweird.f32 %v256
          %vm263 = vmor %vm261, %vm262
          %v264 = vsel %vm263, %v256, %v260
          %v265 = vand.u32 2147483647, %v255
          %vm266 = vcmp.eq.f32.partialorder %v265, 8.507059e+37
          %v267 = vand.u32 %v255, 2147483648
          %v268 = vor.u32 1.1754944e-38, %v267
          %v269 = vsel %vm266, %v268, %v264
          %v270 = vmul.f32 1.0, %v269
          %v271 = vmul.f32 %v246, %v270
          %v272 = vmul.f32 %v248, %v270
          %v273 = vmul.f32 %v250, %v270
          %v274 = vmul.f32 %v252, %v270
          %v275 = vsub.f32 1.0, %v234
          %v276 = vsub.f32 1.0, %v235
          %v277 = vsub.f32 1.0, %v236
          %v278 = vsub.f32 1.0, %v237
          %v279 = vsub.f32 1.0, %v271
          %v280 = vsub.f32 1.0, %v272
          %v281 = vsub.f32 1.0, %v273
          %v282 = vsub.f32 1.0, %v274
          %v283 = vadd.f32 %v234, 1e-05
          %v284 = vadd.f32 %v235, 1e-05
          %v285 = vadd.f32 %v236, 1e-05
          %v286 = vadd.f32 %v237, 1e-05
          %v287 = vlog2.pop %v283
          %v288 = vmul.f32 %v287, 0.6931472
          %v289 = vlog2.pop %v284
          %v290 = vmul.f32 %v289, 0.6931472
          %v291 = vlog2.pop %v285
          %v292 = vmul.f32 %v291, 0.6931472
          %v293 = vlog2.pop %v286
          %v294 = vmul.f32 %v293, 0.6931472
          %v295 = vadd.f32 %v271, 1e-05
          %v296 = vadd.f32 %v272, 1e-05
          %v297 = vadd.f32 %v273, 1e-05
          %v298 = vadd.f32 %v274, 1e-05
          %v299 = vlog2.pop %v295
          %v300 = vmul.f32 %v299, 0.6931472
          %v301 = vlog2.pop %v296
          %v302 = vmul.f32 %v301, 0.6931472
          %v303 = vlog2.pop %v297
          %v304 = vmul.f32 %v303, 0.6931472
          %v305 = vlog2.pop %v298
          %v306 = vmul.f32 %v305, 0.6931472
          %v307 = vsub.f32 %v288, %v300
          %v308 = vsub.f32 %v290, %v302
          %v309 = vsub.f32 %v292, %v304
          %v310 = vsub.f32 %v294, %v306
          %v311 = vmul.f32 %v234, %v307
          %v312 = vmul.f32 %v235, %v308
          %v313 = vmul.f32 %v236, %v309
          %v314 = vmul.f32 %v237, %v310
          %v315 = vadd.f32 %v275, 1e-05
          %v316 = vadd.f32 %v276, 1e-05
          %v317 = vadd.f32 %v277, 1e-05
          %v318 = vadd.f32 %v278, 1e-05
          %v319 = vlog2.pop %v315
          %v320 = vmul.f32 %v319, 0.6931472
          %v321 = vlog2.pop %v316
          %v322 = vmul.f32 %v321, 0.6931472
          %v323 = vlog2.pop %v317
          %v324 = vmul.f32 %v323, 0.6931472
          %v325 = vlog2.pop %v318
          %v326 = vmul.f32 %v325, 0.6931472
          %v327 = vadd.f32 %v279, 1e-05
          %v328 = vadd.f32 %v280, 1e-05
          %v329 = vadd.f32 %v281, 1e-05
          %v330 = vadd.f32 %v282, 1e-05
          %v331 = vlog2.pop %v327
          %v332 = vmul.f32 %v331, 0.6931472
          %v333 = vlog2.pop %v328
          %v334 = vmul.f32 %v333, 0.6931472
          %v335 = vlog2.pop %v329
          %v336 = vmul.f32 %v335, 0.6931472
          %v337 = vlog2.pop %v330
          %v338 = vmul.f32 %v337, 0.6931472
          %v339 = vsub.f32 %v320, %v332
          %v340 = vsub.f32 %v322, %v334
          %v341 = vsub.f32 %v324, %v336
          %v342 = vsub.f32 %v326, %v338
          %v343 = vmul.f32 %v275, %v339
          %v344 = vmul.f32 %v276, %v340
          %v345 = vmul.f32 %v277, %v341
          %v346 = vmul.f32 %v278, %v342
          %v347 = vadd.f32 %v311, %v343
          %v348 = vadd.f32 %v312, %v344
          %v349 = vadd.f32 %v313, %v345
          %v350 = vadd.f32 %v314, %v346
          %v351 = vadd.f32 %v347, %v348
          %v352 = vadd.f32 %v351, %v349
          %v353 = vadd.f32 %v352, %v350
          %354 = vst [vmem:[%s225] sm:$0xff] %v353
        $region40: #{tpu_custom_call.1} parent=27 // pred_fallthru
          _
        %p355 = scmp.eq.s32.totalorder %s27, 0
        // Predicated region
        $region41: #{tpu_custom_call.1} parent=27 // pred_check
          %p356 = pneg %p355
        $region42: #{tpu_custom_call.1} parent=27 // pred_check_branch
          %358 = sbr.rel (%p356) target = $region44
        $region43: #{tpu_custom_call.1} parent=27 // pred_region
          %v359 = vld [vmem:[%s189] sm:$0xff]
          %v360 = vld [vmem:[%s189 + $0x8] sm:$0xff]
          %v361 = vld [vmem:[%s189 + $0x10] sm:$0xff]
          %v362 = vld [vmem:[%s189 + $0x18] sm:$0xff]
          %v363 = vld [vmem:[%s199] sm:$0xff]
          %v364 = vld [vmem:[%s199 + $0x8] sm:$0xff]
          %v365 = vld [vmem:[%s199 + $0x10] sm:$0xff]
          %v366 = vld [vmem:[%s199 + $0x18] sm:$0xff]
          %v367 = vmax.f32 %v359, %v360
          %v368 = vmax.f32 %v361, %v362
          %v369 = vmax.f32 %v367, %v368
          %v370 = vsub.f32 %v359, %v369
          %v371 = vsub.f32 %v360, %v369
          %v372 = vsub.f32 %v361, %v369
          %v373 = vsub.f32 %v362, %v369
          %v374 = vmul.f32 %v370, 1.442695
          %v375 = vpow.pop %v374
          %v376 = vmul.f32 %v371, 1.442695
          %v377 = vpow.pop %v376
          %v378 = vmul.f32 %v372, 1.442695
          %v379 = vpow.pop %v378
          %v380 = vmul.f32 %v373, 1.442695
          %v381 = vpow.pop %v380
          %v382 = vadd.f32 %v375, %v377
          %v383 = vadd.f32 %v382, %v379
          %v384 = vadd.f32 %v383, %v381
          %v385 = vrcp.pop %v384
          %v386 = vmul.f32 %v384, %v385
          %v387 = vsub.f32 1.0, %v386
          %v388 = vmul.f32 %v385, %v387
          %v389 = vadd.f32 %v385, %v388
          %vm390 = vweird.f32 %v384
          %vm391 = vweird.f32 %v385
          %vm392 = vmor %vm390, %vm391
          %v393 = vsel %vm392, %v385, %v389
          %v394 = vand.u32 2147483647, %v384
          %vm395 = vcmp.eq.f32.partialorder %v394, 8.507059e+37
          %v396 = vand.u32 %v384, 2147483648
          %v397 = vor.u32 1.1754944e-38, %v396
          %v398 = vsel %vm395, %v397, %v393
          %v399 = vmul.f32 1.0, %v398
          %v400 = vmul.f32 %v375, %v399
          %v401 = vmul.f32 %v377, %v399
          %v402 = vmul.f32 %v379, %v399
          %v403 = vmul.f32 %v381, %v399
          %v404 = vsub.f32 1.0, %v363
          %v405 = vsub.f32 1.0, %v364
          %v406 = vsub.f32 1.0, %v365
          %v407 = vsub.f32 1.0, %v366
          %v408 = vsub.f32 1.0, %v400
          %v409 = vsub.f32 1.0, %v401
          %v410 = vsub.f32 1.0, %v402
          %v411 = vsub.f32 1.0, %v403
          %v412 = vadd.f32 %v363, 1e-05
          %v413 = vadd.f32 %v364, 1e-05
          %v414 = vadd.f32 %v365, 1e-05
          %v415 = vadd.f32 %v366, 1e-05
          %v416 = vlog2.pop %v412
          %v417 = vmul.f32 %v416, 0.6931472
          %v418 = vlog2.pop %v413
          %v419 = vmul.f32 %v418, 0.6931472
          %v420 = vlog2.pop %v414
          %v421 = vmul.f32 %v420, 0.6931472
          %v422 = vlog2.pop %v415
          %v423 = vmul.f32 %v422, 0.6931472
          %v424 = vadd.f32 %v400, 1e-05
          %v425 = vadd.f32 %v401, 1e-05
          %v426 = vadd.f32 %v402, 1e-05
          %v427 = vadd.f32 %v403, 1e-05
          %v428 = vlog2.pop %v424
          %v429 = vmul.f32 %v428, 0.6931472
          %v430 = vlog2.pop %v425
          %v431 = vmul.f32 %v430, 0.6931472
          %v432 = vlog2.pop %v426
          %v433 = vmul.f32 %v432, 0.6931472
          %v434 = vlog2.pop %v427
          %v435 = vmul.f32 %v434, 0.6931472
          %v436 = vsub.f32 %v417, %v429
          %v437 = vsub.f32 %v419, %v431
          %v438 = vsub.f32 %v421, %v433
          %v439 = vsub.f32 %v423, %v435
          %v440 = vmul.f32 %v363, %v436
          %v441 = vmul.f32 %v364, %v437
          %v442 = vmul.f32 %v365, %v438
          %v443 = vmul.f32 %v366, %v439
          %v444 = vadd.f32 %v404, 1e-05
          %v445 = vadd.f32 %v405, 1e-05
          %v446 = vadd.f32 %v406, 1e-05
          %v447 = vadd.f32 %v407, 1e-05
          %v448 = vlog2.pop %v444
          %v449 = vmul.f32 %v448, 0.6931472
          %v450 = vlog2.pop %v445
          %v451 = vmul.f32 %v450, 0.6931472
          %v452 = vlog2.pop %v446
          %v453 = vmul.f32 %v452, 0.6931472
          %v454 = vlog2.pop %v447
          %v455 = vmul.f32 %v454, 0.6931472
          %v456 = vadd.f32 %v408, 1e-05
          %v457 = vadd.f32 %v409, 1e-05
          %v458 = vadd.f32 %v410, 1e-05
          %v459 = vadd.f32 %v411, 1e-05
          %v460 = vlog2.pop %v456
          %v461 = vmul.f32 %v460, 0.6931472
          %v462 = vlog2.pop %v457
          %v463 = vmul.f32 %v462, 0.6931472
          %v464 = vlog2.pop %v458
          %v465 = vmul.f32 %v464, 0.6931472
          %v466 = vlog2.pop %v459
          %v467 = vmul.f32 %v466, 0.6931472
          %v468 = vsub.f32 %v449, %v461
          %v469 = vsub.f32 %v451, %v463
          %v470 = vsub.f32 %v453, %v465
          %v471 = vsub.f32 %v455, %v467
          %v472 = vmul.f32 %v404, %v468
          %v473 = vmul.f32 %v405, %v469
          %v474 = vmul.f32 %v406, %v470
          %v475 = vmul.f32 %v407, %v471
          %v476 = vadd.f32 %v440, %v472
          %v477 = vadd.f32 %v441, %v473
          %v478 = vadd.f32 %v442, %v474
          %v479 = vadd.f32 %v443, %v475
          %v480 = vadd.f32 %v476, %v477
          %v481 = vadd.f32 %v480, %v478
          %v482 = vadd.f32 %v481, %v479
          %v483 = vlaneseq
          %v484 = vshrl.u32 %v483, 7
          %v485 = vlaneseq
          %v486 = vand.u32 %v485, 127
          %s487 = smul.u32 %s27, 8
          %s488 = sadd.s32 %s487, 0
          %v489 = vstv %s488
          %v490 = vadd.s32 %v489, %v484
          %v491 = vmul.u32 %v490, 128
          %v492 = vadd.s32 %v491, %v486
          %vm493 = vcmp.lt.s32.totalorder %v492, 256
          %v494 = vsel %vm493, %v482, 0.0
          %495 = vst [vmem:[%s225] sm:$0xff] %v494
        $region44: #{tpu_custom_call.1} parent=27 // pred_fallthru
          _
        %s496 = sand.u32 %s100, 1
        %s497 = scalar_lea.sflag [#allocation4], %s496
        %s498 = sand.u32 %s100, 1
        %s499 = smul.addr %s498, 8
        %s500 = scalar_lea.vmem [#allocation7], %s499
        // Predicated region
        $region45: #{tpu_custom_call.1} parent=27 // pred_check
          %p501 = pneg %p110
        $region46: #{tpu_custom_call.1} parent=27 // pred_check_branch
          %503 = sbr.rel (%p501) target = $region48
        $region47: #{tpu_custom_call.1} parent=27 // pred_region
          %505 = vsyncadd %s497, 0
          %s506 = sadd.s32 %s27, %s26
          %s507 = smul.addr %s506, 8
          %s508 = scalar_lea.hbm %s2, %s507
          %s510 = sshll.u32 %s500, 4
          %s511 = int_to_ptr.vmem [resolvable:$true] %s510
          %s512 = sshll.u32 %s508, 4
          %s513 = int_to_ptr.hbm [resolvable:$true] %s512
          %515 = dma.vmem_to_hbm [thread:$0]  %s511, 128, %s513, %s497
        $region48: #{tpu_custom_call.1} parent=27 // pred_fallthru
          _
      $region28: #{tpu_custom_call.1} parent=5 // pred_fallthru
        _
      %p516 = scmp.le.s32.totalorder 2, %s17
      // Predicated region
      $region49: #{tpu_custom_call.1} parent=5 // pred_check
        %p517 = pneg %p516
      $region50: #{tpu_custom_call.1} parent=5 // pred_check_branch
        %519 = sbr.rel (%p517) target = $region52
      $region51: #{tpu_custom_call.1} parent=5 // pred_region
        %s520 = ssub.s32 %s17, 2
        // Predicated region
        $region53: #{tpu_custom_call.1} parent=51 // pred_check
          %p521 = pneg %p116
        $region54: #{tpu_custom_call.1} parent=51 // pred_check_branch
          %523 = sbr.rel (%p521) target = $region56
        $region55: #{tpu_custom_call.1} parent=51 // pred_region
          %s524 = sand.u32 %s101, 1
          %s525 = scalar_lea.sflag [#allocation4], %s524
          %s526 = sand.u32 %s101, 1
          %s527 = smul.addr %s526, 8
          %s528 = scalar_lea.vmem [#allocation7], %s527
          %530 = dma.done %s525, 128
        $region56: #{tpu_custom_call.1} parent=51 // pred_fallthru
          _
      $region52: #{tpu_custom_call.1} parent=5 // pred_fallthru
        _
    $region6: #{tpu_custom_call.1} parent=1 // loop_footer
      %s21 = sadd.s32 1, %s17
    $region7: #{tpu_custom_call.1} parent=1 // loop_footer_branch
      %16 = sbr.rel target = $region3
    $region8: #{tpu_custom_call.1} parent=1 // loop_exit
      _
    %531 = vsyncpa [#allocation3], 1
    %s532 = scalar_lea.sflag [#allocation3], 1
    %533 = vsyncpa %s532, 1
    %534 = vsyncpa [#allocation6], 1
    %s535 = scalar_lea.sflag [#allocation6], 1
    %536 = vsyncpa %s535, 1
    %537 = vsyncpa [#allocation4], 1
    %s538 = scalar_lea.sflag [#allocation4], 1
    %539 = vsyncpa %s538, 1

</llo_original>
